<compile_context>
chip_gen: v7x
topology: tpu7x:2x2x1
jax: 0.10.0
libtpu: 0.0.40
codegen_flags: <defaults>
</compile_context>

<pallas_src>
import functools

import jax
import jax.numpy as jnp
from jax.experimental import pallas as pl
from jax.experimental.pallas import tpu as pltpu


def _round_up(x: int, m: int) -> int:
    return (x + m - 1) // m * m


def _dice_kernel(pred_ref, gt_ref, out_ref, acc_i_ref, acc_d_ref, *, eps: float):
    k = pl.program_id(1)

    @pl.when(k == 0)
    def _():
        acc_i_ref[...] = jnp.zeros_like(acc_i_ref)
        acc_d_ref[...] = jnp.zeros_like(acc_d_ref)

    p = pred_ref[...].astype(jnp.float32)
    g = gt_ref[...].astype(jnp.float32)

    # Per-row partial reductions over this (TN, TK) chunk of the planes.
    acc_i_ref[...] += jnp.sum(g * p, axis=-1, keepdims=True)   # intersection
    acc_d_ref[...] += jnp.sum(p + g, axis=-1, keepdims=True)   # fused p_sum+g_sum

    @pl.when(k == pl.num_programs(1) - 1)
    def _():
        terms = 1.0 - (2.0 * acc_i_ref[...] + eps) / (acc_d_ref[...] + eps)
        # One partial (sum of per-plane dice terms) per row-block; padded
        # zero rows contribute exactly 0.
        out_ref[0, 0] = jnp.sum(terms)


def dice_loss(pred: jax.Array, gt: jax.Array, eps: float = 1e-6) -> jax.Array:
    """Soft Dice loss matching the PyTorch `Dice` module forward.

    pred, gt: (..., H, W). Reduces each (H, W) plane, then means over the
    leading dims. Returns a float32 scalar.
    """
    assert pred.shape == gt.shape, "pred/gt shape mismatch"
    *lead, H, W = pred.shape
    n = 1
    for d in lead:
        n *= d
    hw = H * W

    pred_f = pred.reshape(n, hw)
    gt_f = gt.reshape(n, hw)

    itemsize = jnp.dtype(pred.dtype).itemsize
    budget = 2 * 1024 * 1024  # bytes per input tile: safe on v5e/v6e/v7x VMEM

    hw_lane = _round_up(hw, 128)          # lane-dense last dim
    row_bytes = hw_lane * itemsize

    if row_bytes * 8 <= budget:
        # Whole planes fit: one k-step, many rows per block.
        tk = hw_lane
        tn = min(_round_up(n, 8), max(8, (budget // row_bytes) // 8 * 8))
    else:
        # Huge planes: tile within the plane along the reduction (k) axis.
        tn = 8
        tk = max(128, (budget // (tn * itemsize)) // 128 * 128)

    hw_pad = _round_up(hw_lane, tk)
    n_pad = _round_up(n, tn)

    if hw_pad != hw or n_pad != n:
        pred_f = jnp.pad(pred_f, ((0, n_pad - n), (0, hw_pad - hw)))
        gt_f = jnp.pad(gt_f, ((0, n_pad - n), (0, hw_pad - hw)))

    nb_n = n_pad // tn
    nb_k = hw_pad // tk

    kernel = functools.partial(_dice_kernel, eps=float(eps))

    partials = pl.pallas_call(
        kernel,
        out_shape=jax.ShapeDtypeStruct((nb_n, 1), jnp.float32),
        grid_spec=pltpu.PrefetchScalarGridSpec(
            num_scalar_prefetch=0,
            grid=(nb_n, nb_k),
            in_specs=[
                pl.BlockSpec((tn, tk), lambda i, k: (i, k)),
                pl.BlockSpec((tn, tk), lambda i, k: (i, k)),
            ],
            out_specs=pl.BlockSpec(
                (1, 1), lambda i, k: (i, 0), memory_space=pltpu.SMEM
            ),
            scratch_shapes=[
                pltpu.VMEM((tn, 1), jnp.float32),  # per-row intersection acc
                pltpu.VMEM((tn, 1), jnp.float32),  # per-row denominator acc
            ],
        ),
        compiler_params=pltpu.CompilerParams(
            dimension_semantics=("parallel", "arbitrary"),
        ),
        cost_estimate=pl.CostEstimate(
            flops=4 * n_pad * hw_pad,
            transcendentals=0,
            bytes_accessed=2 * n_pad * hw_pad * itemsize + nb_n * 4,
        ),
    )(pred_f, gt_f)

    # Mean over the true number of (B, C) planes (padded rows contributed 0).
    return jnp.sum(partials) / jnp.float32(n)


def _dice_ref(pred, gt, eps=1e-6):
    # Pure-JAX reference mirroring the PyTorch forward.
    intersection = (gt * pred).sum((-2, -1))
    return (
        1.0
        - (2.0 * intersection + eps)
        / (gt.sum((-2, -1)) + pred.sum((-2, -1)) + eps)
    ).mean()


if __name__ == "__main__":
    key = jax.random.PRNGKey(0)
    k1, k2 = jax.random.split(key)

    B, C, H, W = 2, 4, 16, 16
    # pred: sigmoid-like probabilities, gt: binary mask, both float32 NCHW
    pred = jax.nn.sigmoid(jax.random.normal(k1, (B, C, H, W), dtype=jnp.float32))
    gt = (jax.random.uniform(k2, (B, C, H, W)) > 0.5).astype(jnp.float32)

    loss = dice_loss(pred, gt)
    loss = jax.block_until_ready(loss)

    ref = _dice_ref(pred, gt)
    if not jnp.allclose(loss, ref, atol=1e-5, rtol=1e-5):
        raise AssertionError(f"mismatch: pallas={loss} ref={ref}")

    print("KERNEL_OK")
</pallas_src>

<mosaic_0001>
module attributes {stable_mosaic.version = 11 : i64} {
  func.func @_dice_kernel(%arg0: i32, %arg1: i32, %arg2: memref<8x256xf32, #tpu.memory_space<vmem>>, %arg3: memref<8x256xf32, #tpu.memory_space<vmem>>, %arg4: memref<1x1xf32, #tpu.memory_space<smem>>, %arg5: memref<8x1xf32, #tpu.memory_space<vmem>>, %arg6: memref<8x1xf32, #tpu.memory_space<vmem>>) attributes {dimension_semantics = [#tpu.dimension_semantics<parallel>, #tpu.dimension_semantics<arbitrary>], iteration_bounds = array<i64: 1, 1>, scalar_prefetch = 0 : i64, scratch_operands = 2 : i64, tpu.core_type = #tpu.core_type<tc>, window_params = [{transform_indices = @transform_0, window_bounds = array<i64: 8, 256>}, {transform_indices = @transform_1, window_bounds = array<i64: 8, 256>}, {transform_indices = @transform_2, window_bounds = array<i64: 1, 1>}]} {
    %c0_i32 = arith.constant 0 : i32
    %0 = arith.cmpi eq, %arg1, %c0_i32 : i32
    %1 = arith.extui %0 : i1 to i32
    %c0_i32_0 = arith.constant 0 : i32
    %2 = arith.cmpi ne, %1, %c0_i32_0 : i32
    scf.if %2 {
      %cst_15 = arith.constant 0.000000e+00 : f32
      %20 = vector.broadcast %cst_15 : f32 to vector<8x1xf32>
      %c0_16 = arith.constant 0 : index
      %c0_17 = arith.constant 0 : index
      %21 = vector.load %arg5[%c0_16, %c0_17] : memref<8x1xf32, #tpu.memory_space<vmem>>, vector<8x1xf32>
      tpu.vector_store %arg5[%c0_16, %c0_17], %20 {strides = array<i32>} : memref<8x1xf32, #tpu.memory_space<vmem>>, vector<8x1xf32>,
      %cst_18 = arith.constant 0.000000e+00 : f32
      %22 = vector.broadcast %cst_18 : f32 to vector<8x1xf32>
      %c0_19 = arith.constant 0 : index
      %c0_20 = arith.constant 0 : index
      %23 = vector.load %arg6[%c0_19, %c0_20] : memref<8x1xf32, #tpu.memory_space<vmem>>, vector<8x1xf32>
      tpu.vector_store %arg6[%c0_19, %c0_20], %22 {strides = array<i32>} : memref<8x1xf32, #tpu.memory_space<vmem>>, vector<8x1xf32>,
    } else {
    }
    %c0 = arith.constant 0 : index
    %c0_1 = arith.constant 0 : index
    %3 = vector.load %arg2[%c0, %c0_1] : memref<8x256xf32, #tpu.memory_space<vmem>>, vector<8x256xf32>
    %c0_2 = arith.constant 0 : index
    %c0_3 = arith.constant 0 : index
    %4 = vector.load %arg3[%c0_2, %c0_3] : memref<8x256xf32, #tpu.memory_space<vmem>>, vector<8x256xf32>
    %c0_4 = arith.constant 0 : index
    %c0_5 = arith.constant 0 : index
    %5 = vector.load %arg5[%c0_4, %c0_5] : memref<8x1xf32, #tpu.memory_space<vmem>>, vector<8x1xf32>
    %6 = arith.mulf %4, %3 : vector<8x256xf32>
    %cst = arith.constant dense<0.000000e+00> : vector<8xf32>
    %7 = vector.multi_reduction <add>, %6, %cst [1] : vector<8x256xf32> to vector<8xf32>
    %8 = vector.shape_cast %7 : vector<8xf32> to vector<8x1xf32>
    %9 = arith.addf %5, %8 : vector<8x1xf32>
    %c0_6 = arith.constant 0 : index
    %c0_7 = arith.constant 0 : index
    %10 = vector.load %arg5[%c0_6, %c0_7] : memref<8x1xf32, #tpu.memory_space<vmem>>, vector<8x1xf32>
    tpu.vector_store %arg5[%c0_6, %c0_7], %9 {strides = array<i32>} : memref<8x1xf32, #tpu.memory_space<vmem>>, vector<8x1xf32>,
    %c0_8 = arith.constant 0 : index
    %c0_9 = arith.constant 0 : index
    %11 = vector.load %arg6[%c0_8, %c0_9] : memref<8x1xf32, #tpu.memory_space<vmem>>, vector<8x1xf32>
    %12 = arith.addf %3, %4 : vector<8x256xf32>
    %cst_10 = arith.constant dense<0.000000e+00> : vector<8xf32>
    %13 = vector.multi_reduction <add>, %12, %cst_10 [1] : vector<8x256xf32> to vector<8xf32>
    %14 = vector.shape_cast %13 : vector<8xf32> to vector<8x1xf32>
    %15 = arith.addf %11, %14 : vector<8x1xf32>
    %c0_11 = arith.constant 0 : index
    %c0_12 = arith.constant 0 : index
    %16 = vector.load %arg6[%c0_11, %c0_12] : memref<8x1xf32, #tpu.memory_space<vmem>>, vector<8x1xf32>
    tpu.vector_store %arg6[%c0_11, %c0_12], %15 {strides = array<i32>} : memref<8x1xf32, #tpu.memory_space<vmem>>, vector<8x1xf32>,
    %c0_i32_13 = arith.constant 0 : i32
    %17 = arith.cmpi eq, %arg1, %c0_i32_13 : i32
    %18 = arith.extui %17 : i1 to i32
    %c0_i32_14 = arith.constant 0 : i32
    %19 = arith.cmpi ne, %18, %c0_i32_14 : i32
    scf.if %19 {
      %c0_15 = arith.constant 0 : index
      %c0_16 = arith.constant 0 : index
      %20 = vector.load %arg5[%c0_15, %c0_16] : memref<8x1xf32, #tpu.memory_space<vmem>>, vector<8x1xf32>
      %cst_17 = arith.constant 2.000000e+00 : f32
      %21 = vector.broadcast %cst_17 : f32 to vector<8x1xf32>
      %22 = arith.mulf %21, %20 : vector<8x1xf32>
      %cst_18 = arith.constant 9.99999997E-7 : f32
      %23 = vector.broadcast %cst_18 : f32 to vector<8x1xf32>
      %24 = arith.addf %22, %23 : vector<8x1xf32>
      %c0_19 = arith.constant 0 : index
      %c0_20 = arith.constant 0 : index
      %25 = vector.load %arg6[%c0_19, %c0_20] : memref<8x1xf32, #tpu.memory_space<vmem>>, vector<8x1xf32>
      %cst_21 = arith.constant 9.99999997E-7 : f32
      %26 = vector.broadcast %cst_21 : f32 to vector<8x1xf32>
      %27 = arith.addf %25, %26 : vector<8x1xf32>
      %28 = arith.divf %24, %27 : vector<8x1xf32>
      %cst_22 = arith.constant 1.000000e+00 : f32
      %29 = vector.broadcast %cst_22 : f32 to vector<8x1xf32>
      %30 = arith.subf %29, %28 : vector<8x1xf32>
      %31 = vector.shape_cast %30 : vector<8x1xf32> to vector<1x8x1xf32>
      %cst_23 = arith.constant dense<0.000000e+00> : vector<1xf32>
      %32 = vector.multi_reduction <add>, %31, %cst_23 [1, 2] : vector<1x8x1xf32> to vector<1xf32>
      %33 = vector.shape_cast %32 : vector<1xf32> to vector<1x1x1xf32>
      %34 = vector.extract %33[0, 0, 0] : f32 from vector<1x1x1xf32>
      %c0_24 = arith.constant 0 : index
      %c0_25 = arith.constant 0 : index
      %35 = memref.load %arg4[%c0_24, %c0_25] : memref<1x1xf32, #tpu.memory_space<smem>>
      memref.store %34, %arg4[%c0_24, %c0_25] : memref<1x1xf32, #tpu.memory_space<smem>>
    } else {
    }
    return
  }
  func.func @transform_0(%arg0: i32, %arg1: i32) -> (i32, i32) {
    %c0_i32 = arith.constant 0 : i32
    return %arg0, %arg1 : i32, i32
  }
  func.func @transform_1(%arg0: i32, %arg1: i32) -> (i32, i32) {
    %c0_i32 = arith.constant 0 : i32
    return %arg0, %arg1 : i32, i32
  }
  func.func @transform_2(%arg0: i32, %arg1: i32) -> (i32, i32) {
    %c0_i32 = arith.constant 0 : i32
    %c0_i32_0 = arith.constant 0 : i32
    return %arg0, %c0_i32 : i32, i32
  }
}

</mosaic_0001>

<llo_original>
// kernel: tpu_custom_call.1
$region0: #{tpu_custom_call.1}
  #allocation0 [shape = 'u32[]', space=smem, size = 0x4, offset = 0x4, fixed_abs, tag = 'smem constant byte address 0x4 - core index']
  #allocation1 [shape = 'u32[144,128]{1,0:T(1,128)}', space=vmem, size = 0x12000, scoped, tag = 'internal scratch']
  #allocation2 [shape = 'f32[8,1]{1,0:T(8,128)}', space=vmem, size = 0x1000, scoped, tag = 'scratch operand']
  #allocation3 [shape = 'f32[8,1]{1,0:T(8,128)}', space=vmem, size = 0x1000, scoped, tag = 'scratch operand']
  %s0 = inlined_call_operand.hbm [shape: f32[8,256], index: 0, kind: input, shape index: {}]
  %s1 = inlined_call_operand.hbm [shape: f32[8,256], index: 1, kind: input, shape index: {}]
  %s2 = inlined_call_operand.hbm [shape: f32[1,1], index: 2, kind: output, shape index: {}]
  %s3 = sld [smem:[#allocation0]]
  $region34: #{tpu_custom_call.1} parent=0
    _
  %s5 = ssub.s32 1, %s3
  %s6 = scalar_select 0, %s5, %s3
  $region1: #{tpu_custom_call.1} parent=0
    #allocation4 [shape = 'u8[8192]{0}', space=vmem, size = 0x2000, scoped, tag = 'input window, operand 0, single buffered']
    #allocation5 [shape = 's32[1]{0}', space=sflag, size = 0x4, scoped, tag = 'scoped memory for tpu_custom_call.1']
    #allocation6 [shape = 's32[1]{0}', space=sflag, size = 0x4, scoped, tag = 'scoped memory for tpu_custom_call.1']
    #allocation7 [shape = 'u8[8192]{0}', space=vmem, size = 0x2000, scoped, tag = 'input window, operand 1, single buffered']
    #allocation8 [shape = 's32[1]{0}', space=sflag, size = 0x4, scoped, tag = 'scoped memory for tpu_custom_call.1']
    #allocation9 [shape = 'u8[512]{0}', space=smem, size = 0x200, scoped, tag = 'output window, operand 0, single buffered']
    %7 = vsyncpa [#allocation5], 0
    %8 = vsyncpa [#allocation8], 0
    %9 = vsyncpa [#allocation6], 0
    // Predicated region
    $region2: #{tpu_custom_call.1} parent=1 // pred_check
      _
    $region3: #{tpu_custom_call.1} parent=1 // pred_check_branch
      %11 = sbr.rel (0) target = $region5
    $region4: #{tpu_custom_call.1} parent=1 // pred_region
      %s13 = ssub.s32 256, 256
      %14 = vsyncadd [#allocation5], %s13
      %s16 = sshll.u32 [#allocation4], 4
      %s17 = int_to_ptr.vmem [resolvable:$true] %s16
      %19 = dma.hbm_to_vmem [thread:$0]  %s0, 256, %s17, [#allocation5]
    $region5: #{tpu_custom_call.1} parent=1 // pred_fallthru
      _
    // Predicated region
    $region6: #{tpu_custom_call.1} parent=1 // pred_check
      _
    $region7: #{tpu_custom_call.1} parent=1 // pred_check_branch
      %21 = sbr.rel (0) target = $region9
    $region8: #{tpu_custom_call.1} parent=1 // pred_region
      %s23 = ssub.s32 256, 256
      %24 = vsyncadd [#allocation8], %s23
      %s26 = sshll.u32 [#allocation7], 4
      %s27 = int_to_ptr.vmem [resolvable:$true] %s26
      %29 = dma.hbm_to_vmem [thread:$0]  %s1, 256, %s27, [#allocation8]
    $region9: #{tpu_custom_call.1} parent=1 // pred_fallthru
      _
    // Predicated region
    $region10: #{tpu_custom_call.1} parent=1 // pred_check
      _
    $region11: #{tpu_custom_call.1} parent=1 // pred_check_branch
      %31 = sbr.rel (0) target = $region13
    $region12: #{tpu_custom_call.1} parent=1 // pred_region
      %32 = dma.done [#allocation5], 256
    $region13: #{tpu_custom_call.1} parent=1 // pred_fallthru
      _
    // Predicated region
    $region14: #{tpu_custom_call.1} parent=1 // pred_check
      _
    $region15: #{tpu_custom_call.1} parent=1 // pred_check_branch
      %34 = sbr.rel (0) target = $region17
    $region16: #{tpu_custom_call.1} parent=1 // pred_region
      %35 = dma.done [#allocation8], 256
    $region17: #{tpu_custom_call.1} parent=1 // pred_fallthru
      _
    %p36 = scmp.eq.s32.totalorder 0, 0
    // Predicated region
    $region18: #{tpu_custom_call.1} parent=1 // pred_check
      %p37 = pneg %p36
    $region19: #{tpu_custom_call.1} parent=1 // pred_check_branch
      %39 = sbr.rel (%p37) target = $region21
    $region20: #{tpu_custom_call.1} parent=1 // pred_region
      %vm40 = vcmask 7168
      %41 = vst.msk [vmem:[#allocation2] sm:$0xff] %vm40, 0.0
      %42 = vst.msk [vmem:[#allocation3] sm:$0xff] %vm40, 0.0
    $region21: #{tpu_custom_call.1} parent=1 // pred_fallthru
      _
    %v43 = vld [vmem:[#allocation4] sm:$0xff]
    %v44 = vld [vmem:[#allocation4 + $0x8] sm:$0xff]
    %v45 = vld [vmem:[#allocation7] sm:$0xff]
    %v46 = vld [vmem:[#allocation7 + $0x8] sm:$0xff]
    %v47 = vld [vmem:[#allocation2] sm:$0xff]
    %v48 = vmul.f32 %v45, %v43
    %v49 = vmul.f32 %v46, %v44
    %v50 = vadd.f32 %v48, %v49
    %51 = vadd.xlane.f32.xlu0 %v50
    %v52 = vpop.xlane.xlu0 %51
    %v53 = vadd.f32 %v47, %v52
    %vm54 = vcmask 7168
    %55 = vst.msk [vmem:[#allocation2] sm:$0xff] %vm54, %v53
    %v56 = vld [vmem:[#allocation3] sm:$0xff]
    %v57 = vadd.f32 %v43, %v45
    %v58 = vadd.f32 %v44, %v46
    %v59 = vadd.f32 %v57, %v58
    %60 = vadd.xlane.f32.xlu0 %v59
    %v61 = vpop.xlane.xlu0 %60
    %v62 = vadd.f32 %v56, %v61
    %63 = vst.msk [vmem:[#allocation3] sm:$0xff] %vm54, %v62
    // Predicated region
    $region22: #{tpu_custom_call.1} parent=1 // pred_check
      %p64 = pneg %p36
    $region23: #{tpu_custom_call.1} parent=1 // pred_check_branch
      %66 = sbr.rel (%p64) target = $region25
    $region24: #{tpu_custom_call.1} parent=1 // pred_region
      %v67 = vld [vmem:[#allocation2] sm:$0xff]
      %v68 = vmul.f32 %v67, 2.0
      %v69 = vadd.f32 %v68, 1e-06
      %v70 = vld [vmem:[#allocation3] sm:$0xff]
      %v71 = vadd.f32 %v70, 1e-06
      %v72 = vrcp.pop %v71
      %v73 = vmul.f32 %v69, %v72
      %v74 = vsub.f32 1.0, %v73
      %v75 = vsel %vm54, %v74, 0.0
      %76 = vadd.xlane.f32.xlu0 %v75
      %v77 = vpop.xlane.xlu0 %76
      %v78 = vrot.slane %v77, 4
      %v79 = vadd.f32 %v77, %v78
      %v80 = vrot.slane %v79, 2
      %v81 = vadd.f32 %v79, %v80
      %v82 = vrot.slane %v81, 1
      %v83 = vadd.f32 %v81, %v82
      %s84 = vtos %v83
      %s85 = scalar_lea.smem [#allocation9], 0
      %86 = sst [smem:[%s85]] %s84
    $region25: #{tpu_custom_call.1} parent=1 // pred_fallthru
      _
    // Predicated region
    $region26: #{tpu_custom_call.1} parent=1 // pred_check
      _
    $region27: #{tpu_custom_call.1} parent=1 // pred_check_branch
      %88 = sbr.rel (0) target = $region29
    $region28: #{tpu_custom_call.1} parent=1 // pred_region
      %s90 = ssub.s32 16, 16
      %91 = vsyncadd [#allocation6], %s90
      %94 = dma.smem_to_hbm [#allocation9], 16, %s2, [#allocation6]
    $region29: #{tpu_custom_call.1} parent=1 // pred_fallthru
      _
    // Predicated region
    $region30: #{tpu_custom_call.1} parent=1 // pred_check
      _
    $region31: #{tpu_custom_call.1} parent=1 // pred_check_branch
      %96 = sbr.rel (0) target = $region33
    $region32: #{tpu_custom_call.1} parent=1 // pred_region
      %97 = dma.done [#allocation6], 16
    $region33: #{tpu_custom_call.1} parent=1 // pred_fallthru
      _
    %98 = sfence
    %99 = vsyncpa [#allocation5], 1
    %100 = vsyncpa [#allocation8], 1
    %101 = vsyncpa [#allocation6], 1

</llo_original>
